<compile_context>
chip_gen: v6e
topology: v6e:2x2x1
jax: 0.10.0
libtpu: 0.0.40
codegen_flags: <defaults>
</compile_context>

<pallas_src>
import functools

import jax
import jax.numpy as jnp
from jax import lax
from jax.experimental import pallas as pl
from jax.experimental.pallas import tpu as pltpu

_NEG_LARGE = -1e30  # finite "-inf": avoids NaN rows when a query is fully masked


def _choose_q_tile(lq):
    # Largest of {512, 256, 128} that divides Lq (lane/sublane-friendly for all dtypes),
    # else fall back to the full extent (always legal for a BlockSpec).
    for cand in (512, 256, 128):
        if lq % cand == 0:
            return cand
    return lq


def _sdpa_kernel(q_ref, k_ref, v_ref, out_ref, attn_ref, *, inv_temperature):
    # One (batch, q-tile) per grid step.
    q = q_ref[0] * inv_temperature            # fold 1/temperature into the small (TQ,D) tile
    k = k_ref[0]                              # (Lk, D)
    v = v_ref[0]                              # (Lk, Dv)

    # q @ k^T on the MXU; contract last dims directly, no explicit transpose of k.
    scores = lax.dot_general(q, k, (((1,), (1,)), ((), ())),
                             preferred_element_type=jnp.float32)   # (TQ, Lk) f32

    # numerically stable softmax over the key axis
    m = jnp.max(scores, axis=-1, keepdims=True)
    e = jnp.exp(scores - m)
    denom = jnp.sum(e, axis=-1, keepdims=True)
    p = e * pl.reciprocal(denom, approx=False)   # EUP reciprocal + mul instead of big divide

    attn_ref[0] = p.astype(attn_ref.dtype)
    out = jnp.dot(p.astype(v.dtype), v, preferred_element_type=jnp.float32)
    out_ref[0] = out.astype(out_ref.dtype)


def _sdpa_masked_kernel(q_ref, k_ref, v_ref, mask_ref, out_ref, attn_ref, *, inv_temperature):
    q = q_ref[0] * inv_temperature
    k = k_ref[0]
    v = v_ref[0]
    mask = mask_ref[0]                           # (TQ, Lk) int8, nonzero => masked out

    scores = lax.dot_general(q, k, (((1,), (1,)), ((), ())),
                             preferred_element_type=jnp.float32)
    scores = jnp.where(mask != 0, _NEG_LARGE, scores)

    m = jnp.max(scores, axis=-1, keepdims=True)
    e = jnp.exp(scores - m)
    denom = jnp.sum(e, axis=-1, keepdims=True)
    p = e * pl.reciprocal(denom, approx=False)

    attn_ref[0] = p.astype(attn_ref.dtype)
    out = jnp.dot(p.astype(v.dtype), v, preferred_element_type=jnp.float32)
    out_ref[0] = out.astype(out_ref.dtype)


def scaled_dot_product_attention(q, k, v, temperature, mask=None, attn_dropout=0.0):
    """Pallas-TPU ScaledDotProductAttention forward. Returns (output, attn)."""
    # TODO(synk): train-mode dropout (attn_dropout > 0) would need pltpu.prng_* inside the
    # kernel; with attn_dropout == 0.0 (or eval mode) dropout is the identity, as done here.
    assert attn_dropout == 0.0, "dropout > 0 not implemented (identity in eval mode)"
    B, Lq, D = q.shape
    _, Lk, Dk = k.shape
    _, _, Dv = v.shape
    assert D == Dk and k.shape[0] == B and v.shape[0] == B and v.shape[1] == Lk

    TQ = _choose_q_tile(Lq)
    grid = (B, Lq // TQ)

    attn_dtype = q.dtype                         # torch parity: softmax keeps the input dtype
    out_shape = (
        jax.ShapeDtypeStruct((B, Lq, Dv), q.dtype),       # output
        jax.ShapeDtypeStruct((B, Lq, Lk), attn_dtype),    # attention probabilities
    )
    out_specs = (
        pl.BlockSpec((1, TQ, Dv), lambda b, i: (b, i, 0)),
        pl.BlockSpec((1, TQ, Lk), lambda b, i: (b, i, 0)),
    )
    q_spec = pl.BlockSpec((1, TQ, D), lambda b, i: (b, i, 0))
    k_spec = pl.BlockSpec((1, Lk, D), lambda b, i: (b, 0, 0))
    v_spec = pl.BlockSpec((1, Lk, Dv), lambda b, i: (b, 0, 0))

    # VMEM budget derived from the actual tiles (double-buffered + working copies), with
    # headroom, capped at 64 MiB so the same choice remains valid on v7x.
    def _isz(dt):
        return jnp.dtype(dt).itemsize

    per_step = (
        TQ * D * _isz(q.dtype)
        + Lk * D * _isz(k.dtype)
        + Lk * Dv * _isz(v.dtype)
        + TQ * Dv * _isz(q.dtype)
        + TQ * Lk * _isz(attn_dtype)
        + TQ * Lk * 4                              # f32 scores working tile
        + (TQ * Lk if mask is not None else 0)     # int8 mask tile
    )
    vmem_limit = int(min(64 << 20, max(32 << 20, 3 * per_step + (4 << 20))))

    cp = pltpu.CompilerParams(
        dimension_semantics=("parallel", "parallel"),   # batch and q-tiles shard across cores
        vmem_limit_bytes=vmem_limit,
    )

    inv_temperature = 1.0 / float(temperature)

    if mask is None:
        kernel = functools.partial(_sdpa_kernel, inv_temperature=inv_temperature)
        return pl.pallas_call(
            kernel,
            out_shape=out_shape,
            grid=grid,
            in_specs=[q_spec, k_spec, v_spec],
            out_specs=out_specs,
            compiler_params=cp,
        )(q, k, v)
    else:
        mask_i8 = mask.astype(jnp.int8)            # 1 byte/elem: 4x less mask DMA than int32
        m_spec = pl.BlockSpec((1, TQ, Lk), lambda b, i: (b, i, 0))
        kernel = functools.partial(_sdpa_masked_kernel, inv_temperature=inv_temperature)
        return pl.pallas_call(
            kernel,
            out_shape=out_shape,
            grid=grid,
            in_specs=[q_spec, k_spec, v_spec, m_spec],
            out_specs=out_specs,
            compiler_params=cp,
        )(q, k, v, mask_i8)


def _reference(q, k, v, temperature, mask=None):
    attn = jnp.einsum("bqd,bkd->bqk", q, k).astype(jnp.float32) / temperature
    if mask is not None:
        attn = jnp.where(mask, -jnp.inf, attn)
    attn = jax.nn.softmax(attn, axis=2)
    out = jnp.einsum("bqk,bkd->bqd", attn, v.astype(jnp.float32))
    return out.astype(q.dtype), attn.astype(q.dtype)


if __name__ == "__main__":
    key = jax.random.PRNGKey(0)
    kq, kk, kv, km = jax.random.split(key, 4)

    B, Lq, Lk, D, Dv = 2, 8, 16, 32, 32
    temperature = float(jnp.sqrt(jnp.float32(D)))  # typical value: sqrt(d_k)

    q = jax.random.normal(kq, (B, Lq, D), dtype=jnp.float32)
    k = jax.random.normal(kk, (B, Lk, D), dtype=jnp.float32)
    v = jax.random.normal(kv, (B, Lk, Dv), dtype=jnp.float32)
    # boolean mask (True => masked out), keep at least one unmasked key per query
    mask = jax.random.bernoulli(km, p=0.25, shape=(B, Lq, Lk))
    mask = mask.at[:, :, 0].set(False)

    # unmasked path
    out, attn = scaled_dot_product_attention(q, k, v, temperature, mask=None)
    jax.block_until_ready((out, attn))
    out_ref, attn_ref = _reference(q, k, v, temperature, mask=None)
    assert jnp.allclose(out, out_ref, atol=1e-5, rtol=1e-5)
    assert jnp.allclose(attn, attn_ref, atol=1e-5, rtol=1e-5)

    # masked path
    out_m, attn_m = scaled_dot_product_attention(q, k, v, temperature, mask=mask)
    jax.block_until_ready((out_m, attn_m))
    out_mr, attn_mr = _reference(q, k, v, temperature, mask=mask)
    assert jnp.allclose(out_m, out_mr, atol=1e-5, rtol=1e-5)
    assert jnp.allclose(attn_m, attn_mr, atol=1e-5, rtol=1e-5)

    print("KERNEL_OK")
</pallas_src>

<mosaic_0001>
module attributes {stable_mosaic.version = 11 : i64} {
  func.func @_sdpa_kernel(%arg0: i32, %arg1: i32, %arg2: memref<1x8x32xf32, #tpu.memory_space<vmem>>, %arg3: memref<1x16x32xf32, #tpu.memory_space<vmem>>, %arg4: memref<1x16x32xf32, #tpu.memory_space<vmem>>, %arg5: memref<1x8x32xf32, #tpu.memory_space<vmem>>, %arg6: memref<1x8x16xf32, #tpu.memory_space<vmem>>) attributes {dimension_semantics = [#tpu.dimension_semantics<parallel>, #tpu.dimension_semantics<parallel>], iteration_bounds = array<i64: 2, 1>, scalar_prefetch = 0 : i64, scratch_operands = 0 : i64, tpu.core_type = #tpu.core_type<tc>, window_params = [{transform_indices = @transform_0, window_bounds = array<i64: 1, 8, 32>}, {transform_indices = @transform_1, window_bounds = array<i64: 1, 16, 32>}, {transform_indices = @transform_2, window_bounds = array<i64: 1, 16, 32>}, {transform_indices = @transform_3, window_bounds = array<i64: 1, 8, 32>}, {transform_indices = @transform_4, window_bounds = array<i64: 1, 8, 16>}]} {
    %c0 = arith.constant 0 : index
    %c0_0 = arith.constant 0 : index
    %c0_1 = arith.constant 0 : index
    %0 = vector.load %arg2[%c0, %c0_0, %c0_1] : memref<1x8x32xf32, #tpu.memory_space<vmem>>, vector<1x8x32xf32>
    %1 = vector.shape_cast %0 : vector<1x8x32xf32> to vector<8x32xf32>
    %cst = arith.constant 0.176776692 : f32
    %2 = vector.broadcast %cst : f32 to vector<8x32xf32>
    %3 = arith.mulf %1, %2 : vector<8x32xf32>
    %c0_2 = arith.constant 0 : index
    %c0_3 = arith.constant 0 : index
    %c0_4 = arith.constant 0 : index
    %4 = vector.load %arg3[%c0_2, %c0_3, %c0_4] : memref<1x16x32xf32, #tpu.memory_space<vmem>>, vector<1x16x32xf32>
    %5 = vector.shape_cast %4 : vector<1x16x32xf32> to vector<16x32xf32>
    %c0_5 = arith.constant 0 : index
    %c0_6 = arith.constant 0 : index
    %c0_7 = arith.constant 0 : index
    %6 = vector.load %arg4[%c0_5, %c0_6, %c0_7] : memref<1x16x32xf32, #tpu.memory_space<vmem>>, vector<1x16x32xf32>
    %7 = vector.shape_cast %6 : vector<1x16x32xf32> to vector<16x32xf32>
    %cst_8 = arith.constant dense<0.000000e+00> : vector<8x16xf32>
    %8 = tpu.matmul %3, %5, %cst_8 {dimension_numbers = #tpu.dot_dimension_numbers<[1], [1], [0], [0], [0, 0, 1, 0], [], []>} : vector<8x32xf32>, vector<16x32xf32>, vector<8x16xf32> -> vector<8x16xf32>
    %cst_9 = arith.constant dense<0xFF800000> : vector<8xf32>
    %9 = vector.multi_reduction <maximumf>, %8, %cst_9 [1] : vector<8x16xf32> to vector<8xf32>
    %10 = vector.shape_cast %9 : vector<8xf32> to vector<8x1xf32>
    %11 = vector.broadcast %10 : vector<8x1xf32> to vector<8x16xf32>
    %12 = arith.subf %8, %11 : vector<8x16xf32>
    %13 = math.exp %12 : vector<8x16xf32>
    %cst_10 = arith.constant dense<0.000000e+00> : vector<8xf32>
    %14 = vector.multi_reduction <add>, %13, %cst_10 [1] : vector<8x16xf32> to vector<8xf32>
    %15 = vector.shape_cast %14 : vector<8xf32> to vector<8x1xf32>
    %16 = tpu.reciprocal %15 : vector<8x1xf32> -> vector<8x1xf32>
    %17 = vector.broadcast %16 : vector<8x1xf32> to vector<8x16xf32>
    %18 = arith.mulf %13, %17 : vector<8x16xf32>
    %c0_11 = arith.constant 0 : index
    %c0_12 = arith.constant 0 : index
    %c0_13 = arith.constant 0 : index
    %19 = vector.load %arg6[%c0_11, %c0_12, %c0_13] : memref<1x8x16xf32, #tpu.memory_space<vmem>>, vector<1x8x16xf32>
    %20 = vector.shape_cast %19 : vector<1x8x16xf32> to vector<8x16xf32>
    %21 = vector.shape_cast %18 : vector<8x16xf32> to vector<1x8x16xf32>
    tpu.vector_store %arg6[%c0_11, %c0_12, %c0_13], %21 {strides = array<i32>} : memref<1x8x16xf32, #tpu.memory_space<vmem>>, vector<1x8x16xf32>,
    %cst_14 = arith.constant dense<0.000000e+00> : vector<8x32xf32>
    %22 = tpu.matmul %18, %7, %cst_14 {dimension_numbers = #tpu.dot_dimension_numbers<[1], [0], [0], [1], [0, 0, 1, 1], [], []>} : vector<8x16xf32>, vector<16x32xf32>, vector<8x32xf32> -> vector<8x32xf32>
    %c0_15 = arith.constant 0 : index
    %c0_16 = arith.constant 0 : index
    %c0_17 = arith.constant 0 : index
    %23 = vector.load %arg5[%c0_15, %c0_16, %c0_17] : memref<1x8x32xf32, #tpu.memory_space<vmem>>, vector<1x8x32xf32>
    %24 = vector.shape_cast %23 : vector<1x8x32xf32> to vector<8x32xf32>
    %25 = vector.shape_cast %22 : vector<8x32xf32> to vector<1x8x32xf32>
    tpu.vector_store %arg5[%c0_15, %c0_16, %c0_17], %25 {strides = array<i32>} : memref<1x8x32xf32, #tpu.memory_space<vmem>>, vector<1x8x32xf32>,
    return
  }
  func.func @transform_0(%arg0: i32, %arg1: i32) -> (i32, i32, i32) {
    %c0_i32 = arith.constant 0 : i32
    %c0_i32_0 = arith.constant 0 : i32
    return %arg0, %arg1, %c0_i32 : i32, i32, i32
  }
  func.func @transform_1(%arg0: i32, %arg1: i32) -> (i32, i32, i32) {
    %c0_i32 = arith.constant 0 : i32
    %c0_i32_0 = arith.constant 0 : i32
    %c0_i32_1 = arith.constant 0 : i32
    return %arg0, %c0_i32, %c0_i32_0 : i32, i32, i32
  }
  func.func @transform_2(%arg0: i32, %arg1: i32) -> (i32, i32, i32) {
    %c0_i32 = arith.constant 0 : i32
    %c0_i32_0 = arith.constant 0 : i32
    %c0_i32_1 = arith.constant 0 : i32
    return %arg0, %c0_i32, %c0_i32_0 : i32, i32, i32
  }
  func.func @transform_3(%arg0: i32, %arg1: i32) -> (i32, i32, i32) {
    %c0_i32 = arith.constant 0 : i32
    %c0_i32_0 = arith.constant 0 : i32
    return %arg0, %arg1, %c0_i32 : i32, i32, i32
  }
  func.func @transform_4(%arg0: i32, %arg1: i32) -> (i32, i32, i32) {
    %c0_i32 = arith.constant 0 : i32
    %c0_i32_0 = arith.constant 0 : i32
    return %arg0, %arg1, %c0_i32 : i32, i32, i32
  }
}

</mosaic_0001>

<llo_original>
// kernel: tpu_custom_call.1
$region0: #{tpu_custom_call.1}
  #allocation0 [shape = 'u32[]', space=smem, size = 0x4, offset = 0x4, fixed_abs, tag = 'smem constant byte address 0x4 - core index']
  #allocation1 [shape = 'u32[144,128]{1,0:T(1,128)}', space=vmem, size = 0x12000, scoped, tag = 'internal scratch']
  %s0 = inlined_call_operand.hbm [shape: f32[2,8,32], index: 0, kind: input, shape index: {}]
  %s1 = inlined_call_operand.hbm [shape: f32[2,16,32], index: 1, kind: input, shape index: {}]
  %s2 = inlined_call_operand.hbm [shape: f32[2,16,32], index: 2, kind: input, shape index: {}]
  %s3 = inlined_call_operand.hbm [shape: f32[2,8,32], index: 3, kind: output, shape index: {0}]
  %s4 = inlined_call_operand.hbm [shape: f32[2,8,16], index: 4, kind: output, shape index: {1}]
  %5 = xla_tuple %s3, %s4
  %s6 = sld [smem:[#allocation0]]
  $region65: #{tpu_custom_call.1} parent=0
    _
  %s8 = ssub.s32 1, %s6
  %s9 = scalar_select 0, %s8, %s6
  $region1: #{tpu_custom_call.1} parent=0
    #allocation2 [shape = 'u8[8192]{0}', space=vmem, size = 0x2000, scoped, tag = 'input window, operand 0']
    #allocation3 [shape = 's32[2]{0}', space=sflag, size = 0x8, scoped, tag = 'scoped memory for tpu_custom_call.1']
    #allocation4 [shape = 's32[2]{0}', space=sflag, size = 0x8, scoped, tag = 'scoped memory for tpu_custom_call.1']
    #allocation5 [shape = 'u8[16384]{0}', space=vmem, size = 0x4000, scoped, tag = 'input window, operand 1']
    #allocation6 [shape = 's32[2]{0}', space=sflag, size = 0x8, scoped, tag = 'scoped memory for tpu_custom_call.1']
    #allocation7 [shape = 'u8[16384]{0}', space=vmem, size = 0x4000, scoped, tag = 'input window, operand 2']
    #allocation8 [shape = 'u8[8192]{0}', space=vmem, size = 0x2000, scoped, tag = 'output window, operand 0']
    #allocation9 [shape = 'u8[8192]{0}', space=vmem, size = 0x2000, scoped, tag = 'output window, operand 1']
    #allocation10 [shape = 's32[2]{0}', space=sflag, size = 0x8, scoped, tag = 'scoped memory for tpu_custom_call.1']
    %10 = vsyncpa [#allocation3], 0
    %s11 = scalar_lea.sflag [#allocation3], 1
    %12 = vsyncpa %s11, 0
    %13 = vsyncpa [#allocation6], 0
    %s14 = scalar_lea.sflag [#allocation6], 1
    %15 = vsyncpa %s14, 0
    %16 = vsyncpa [#allocation4], 0
    %s17 = scalar_lea.sflag [#allocation4], 1
    %18 = vsyncpa %s17, 0
    %19 = vsyncpa [#allocation10], 0
    %s20 = scalar_lea.sflag [#allocation10], 1
    %21 = vsyncpa %s20, 0
    loop: start=0, step=1, limit=4
    $region2: #{tpu_custom_call.1} parent=1 // loop_pre_header
      _
    $region3: #{tpu_custom_call.1} parent=1 // loop_header
      %s23 = sphi 0, %s27
      %p24 = scmp.ge.s32.totalorder %s23, 4
      %s30 = sphi 0, %s42
      %s31 = sphi 0, %s38
      %s32 = sphi 0, %s30
      %s33 = sphi 0, %s31
      %s34 = sphi 0, %s32
      %s35 = sphi 0, %s33
      %s47 = sphi 0, %s49
      %s50 = sphi 0, %s47
      %s51 = sphi 0, %s50
      %s67 = sphi 0, %s51
      %s73 = sphi 0, %s75
      %s76 = sphi 0, %s73
      %s77 = sphi 0, %s76
      %s93 = sphi 0, %s77
      %s99 = sphi 0, %s101
      %s102 = sphi 0, %s99
      %s103 = sphi 0, %s102
      %s119 = sphi 0, %s103
      %s127 = sphi 0, %s129
      %s130 = sphi 0, %s127
      %s131 = sphi 0, %s130
      %s147 = sphi 0, %s131
      %s155 = sphi 0, %s157
      %s158 = sphi 0, %s155
      %s159 = sphi 0, %s158
      %s175 = sphi 0, %s159
    $region4: #{tpu_custom_call.1} parent=1 // loop_header_branch
      %26 = sbr.rel (%p24) target = $region8
    $region5: #{tpu_custom_call.1} parent=1 // loop_body
      %s28 = ssub.s32 %s23, 1
      %s29 = ssub.s32 %s23, 2
      %s36 = sadd.s32 1, %s31
      %p37 = scmp.ge.s32.totalorder %s36, 1
      %s38 = scalar_select %p37, 0, %s36
      %s39 = sadd.s32 1, %s30
      %s40 = scalar_select %p37, %s39, %s30
      %p41 = scmp.ge.s32.totalorder %s40, 2
      %s42 = scalar_select %p41, 0, %s40
      %s43 = ssub.s32 %s30, %s42
      %s44 = ssub.s32 %s31, %s38
      %s45 = sor.u32 %s43, %s44
      %p46 = scmp.eq.s32.totalorder %s45, 0
      %s48 = sadd.s32 %s47, 1
      %s49 = scalar_select %p46, %s47, %s48
      %p52 = pneg %p46
      %p53 = scmp.eq.s32.totalorder %s23, 1
      %p54 = por %p52, %p53
      %p55 = scmp.ne.s32.totalorder %s47, %s50
      %p56 = scmp.eq.s32.totalorder %s23, 0
      %p57 = por %p55, %p56
      %p58 = scmp.ne.s32.totalorder %s47, %s50
      %p59 = scmp.eq.s32.totalorder %s28, 1
      %p60 = por %p58, %p59
      %p61 = scmp.ne.s32.totalorder %s50, %s51
      %p62 = scmp.eq.s32.totalorder %s28, 0
      %p63 = por %p61, %p62
      %p64 = scmp.ne.s32.totalorder %s50, %s51
      %p65 = scmp.eq.s32.totalorder %s29, 1
      %p66 = por %p64, %p65
      %p68 = scmp.ne.s32.totalorder %s51, %s67
      %p69 = scmp.eq.s32.totalorder %s29, 0
      %p70 = por %p68, %p69
      %s71 = ssub.s32 %s30, %s42
      %p72 = scmp.eq.s32.totalorder %s71, 0
      %s74 = sadd.s32 %s73, 1
      %s75 = scalar_select %p72, %s73, %s74
      %p78 = pneg %p72
      %p79 = scmp.eq.s32.totalorder %s23, 1
      %p80 = por %p78, %p79
      %p81 = scmp.ne.s32.totalorder %s73, %s76
      %p82 = scmp.eq.s32.totalorder %s23, 0
      %p83 = por %p81, %p82
      %p84 = scmp.ne.s32.totalorder %s73, %s76
      %p85 = scmp.eq.s32.totalorder %s28, 1
      %p86 = por %p84, %p85
      %p87 = scmp.ne.s32.totalorder %s76, %s77
      %p88 = scmp.eq.s32.totalorder %s28, 0
      %p89 = por %p87, %p88
      %p90 = scmp.ne.s32.totalorder %s76, %s77
      %p91 = scmp.eq.s32.totalorder %s29, 1
      %p92 = por %p90, %p91
      %p94 = scmp.ne.s32.totalorder %s77, %s93
      %p95 = scmp.eq.s32.totalorder %s29, 0
      %p96 = por %p94, %p95
      %s97 = ssub.s32 %s30, %s42
      %p98 = scmp.eq.s32.totalorder %s97, 0
      %s100 = sadd.s32 %s99, 1
      %s101 = scalar_select %p98, %s99, %s100
      %p104 = pneg %p98
      %p105 = scmp.eq.s32.totalorder %s23, 1
      %p106 = por %p104, %p105
      %p107 = scmp.ne.s32.totalorder %s99, %s102
      %p108 = scmp.eq.s32.totalorder %s23, 0
      %p109 = por %p107, %p108
      %p110 = scmp.ne.s32.totalorder %s99, %s102
      %p111 = scmp.eq.s32.totalorder %s28, 1
      %p112 = por %p110, %p111
      %p113 = scmp.ne.s32.totalorder %s102, %s103
      %p114 = scmp.eq.s32.totalorder %s28, 0
      %p115 = por %p113, %p114
      %p116 = scmp.ne.s32.totalorder %s102, %s103
      %p117 = scmp.eq.s32.totalorder %s29, 1
      %p118 = por %p116, %p117
      %p120 = scmp.ne.s32.totalorder %s103, %s119
      %p121 = scmp.eq.s32.totalorder %s29, 0
      %p122 = por %p120, %p121
      %s123 = ssub.s32 %s30, %s42
      %s124 = ssub.s32 %s31, %s38
      %s125 = sor.u32 %s123, %s124
      %p126 = scmp.eq.s32.totalorder %s125, 0
      %s128 = sadd.s32 %s127, 1
      %s129 = scalar_select %p126, %s127, %s128
      %p132 = pneg %p126
      %p133 = scmp.eq.s32.totalorder %s23, 1
      %p134 = por %p132, %p133
      %p135 = scmp.ne.s32.totalorder %s127, %s130
      %p136 = scmp.eq.s32.totalorder %s23, 0
      %p137 = por %p135, %p136
      %p138 = scmp.ne.s32.totalorder %s127, %s130
      %p139 = scmp.eq.s32.totalorder %s28, 1
      %p140 = por %p138, %p139
      %p141 = scmp.ne.s32.totalorder %s130, %s131
      %p142 = scmp.eq.s32.totalorder %s28, 0
      %p143 = por %p141, %p142
      %p144 = scmp.ne.s32.totalorder %s130, %s131
      %p145 = scmp.eq.s32.totalorder %s29, 1
      %p146 = por %p144, %p145
      %p148 = scmp.ne.s32.totalorder %s131, %s147
      %p149 = scmp.eq.s32.totalorder %s29, 0
      %p150 = por %p148, %p149
      %s151 = ssub.s32 %s30, %s42
      %s152 = ssub.s32 %s31, %s38
      %s153 = sor.u32 %s151, %s152
      %p154 = scmp.eq.s32.totalorder %s153, 0
      %s156 = sadd.s32 %s155, 1
      %s157 = scalar_select %p154, %s155, %s156
      %p160 = pneg %p154
      %p161 = scmp.eq.s32.totalorder %s23, 1
      %p162 = por %p160, %p161
      %p163 = scmp.ne.s32.totalorder %s155, %s158
      %p164 = scmp.eq.s32.totalorder %s23, 0
      %p165 = por %p163, %p164
      %p166 = scmp.ne.s32.totalorder %s155, %s158
      %p167 = scmp.eq.s32.totalorder %s28, 1
      %p168 = por %p166, %p167
      %p169 = scmp.ne.s32.totalorder %s158, %s159
      %p170 = scmp.eq.s32.totalorder %s28, 0
      %p171 = por %p169, %p170
      %p172 = scmp.ne.s32.totalorder %s158, %s159
      %p173 = scmp.eq.s32.totalorder %s29, 1
      %p174 = por %p172, %p173
      %p176 = scmp.ne.s32.totalorder %s159, %s175
      %p177 = scmp.eq.s32.totalorder %s29, 0
      %p178 = por %p176, %p177
      %p179 = scmp.le.s32.totalorder 1, %s23
      %p180 = scmp.lt.s32.totalorder %s23, 3
      %p181 = pnand %p179, %p180
      %p182 = pneg %p181
      // Predicated region
      $region9: #{tpu_custom_call.1} parent=5 // pred_check
        _
      $region10: #{tpu_custom_call.1} parent=5 // pred_check_branch
        %184 = sbr.rel (%p181) target = $region12
      $region11: #{tpu_custom_call.1} parent=5 // pred_region
        %s185 = ssub.s32 %s23, 1
      $region12: #{tpu_custom_call.1} parent=5 // pred_fallthru
        _
      %p186 = scmp.lt.s32.totalorder %s23, 2
      // Predicated region
      $region13: #{tpu_custom_call.1} parent=5 // pred_check
        %p187 = pneg %p186
      $region14: #{tpu_custom_call.1} parent=5 // pred_check_branch
        %189 = sbr.rel (%p187) target = $region16
      $region15: #{tpu_custom_call.1} parent=5 // pred_region
        // Predicated region
        $region17: #{tpu_custom_call.1} parent=15 // pred_check
          %p190 = pneg %p57
        $region18: #{tpu_custom_call.1} parent=15 // pred_check_branch
          %192 = sbr.rel (%p190) target = $region20
        $region19: #{tpu_custom_call.1} parent=15 // pred_region
          %s193 = sand.u32 %s47, 1
          %s194 = scalar_lea.sflag [#allocation3], %s193
          %s195 = sand.u32 %s47, 1
          %s196 = smul.addr %s195, 8
          %s197 = scalar_lea.vmem [#allocation2], %s196
          %s199 = ssub.s32 128, 128
          %200 = vsyncadd %s194, %s199
          %s201 = sadd.s32 %s31, %s30
          %s202 = smul.addr %s201, 128
          %s203 = scalar_lea.hbm %s0, %s202
          %s205 = sshll.u32 %s197, 4
          %s206 = int_to_ptr.vmem [resolvable:$true] %s205
          %208 = dma.hbm_to_vmem [thread:$0]  %s203, 128, %s206, %s194
        $region20: #{tpu_custom_call.1} parent=15 // pred_fallthru
          _
        // Predicated region
        $region21: #{tpu_custom_call.1} parent=15 // pred_check
          %p209 = pneg %p83
        $region22: #{tpu_custom_call.1} parent=15 // pred_check_branch
          %211 = sbr.rel (%p209) target = $region24
        $region23: #{tpu_custom_call.1} parent=15 // pred_region
          %s212 = sand.u32 %s23, 1
          %s213 = scalar_lea.sflag [#allocation6], %s212
          %s214 = sand.u32 %s73, 1
          %s215 = smul.addr %s214, 16
          %s216 = scalar_lea.vmem [#allocation5], %s215
          %s218 = ssub.s32 256, 256
          %219 = vsyncadd %s213, %s218
          %s220 = smul.addr %s30, 2
          %s221 = smul.addr %s220, 128
          %s222 = scalar_lea.hbm %s1, %s221
          %s223 = sshll.u32 %s216, 4
          %s224 = int_to_ptr.vmem [resolvable:$true] %s223
          %229 = dma.hbm_to_vmem [thread:$0]  %s222, 256, %s224, %s213, 128, 128, 8
        $region24: #{tpu_custom_call.1} parent=15 // pred_fallthru
          _
        // Predicated region
        $region25: #{tpu_custom_call.1} parent=15 // pred_check
          %p230 = pneg %p109
        $region26: #{tpu_custom_call.1} parent=15 // pred_check_branch
          %232 = sbr.rel (%p230) target = $region28
        $region27: #{tpu_custom_call.1} parent=15 // pred_region
          %s233 = sand.u32 %s23, 1
          %s234 = scalar_lea.sflag [#allocation6], %s233
          %s235 = sand.u32 %s99, 1
          %s236 = smul.addr %s235, 16
          %s237 = scalar_lea.vmem [#allocation7], %s236
          %s239 = ssub.s32 256, 256
          %240 = vsyncadd %s234, %s239
          %s241 = smul.addr %s30, 2
          %s242 = smul.addr %s241, 128
          %s243 = scalar_lea.hbm %s2, %s242
          %s244 = sshll.u32 %s237, 4
          %s245 = int_to_ptr.vmem [resolvable:$true] %s244
          %250 = dma.hbm_to_vmem [thread:$0]  %s243, 256, %s245, %s234, 128, 128, 8
        $region28: #{tpu_custom_call.1} parent=15 // pred_fallthru
          _
      $region16: #{tpu_custom_call.1} parent=5 // pred_fallthru
        _
      %p251 = scmp.le.s32.totalorder 1, %s23
      %p252 = scmp.lt.s32.totalorder %s23, 3
      %p253 = pnand %p251, %p252
      %p254 = pneg %p253
      // Predicated region
      $region29: #{tpu_custom_call.1} parent=5 // pred_check
        _
      $region30: #{tpu_custom_call.1} parent=5 // pred_check_branch
        %256 = sbr.rel (%p253) target = $region32
      $region31: #{tpu_custom_call.1} parent=5 // pred_region
        %s257 = ssub.s32 %s23, 1
        %s258 = sand.u32 %s50, 1
        %s259 = scalar_lea.sflag [#allocation3], %s258
        %s260 = sand.u32 %s50, 1
        %s261 = smul.addr %s260, 8
        %s262 = scalar_lea.vmem [#allocation2], %s261
        // Predicated region
        $region33: #{tpu_custom_call.1} parent=31 // pred_check
          %p263 = pneg %p63
        $region34: #{tpu_custom_call.1} parent=31 // pred_check_branch
          %265 = sbr.rel (%p263) target = $region36
        $region35: #{tpu_custom_call.1} parent=31 // pred_region
          %266 = dma.done %s259, 128
        $region36: #{tpu_custom_call.1} parent=31 // pred_fallthru
          _
        %s267 = sand.u32 %s28, 1
        %s268 = scalar_lea.sflag [#allocation6], %s267
        %s269 = sand.u32 %s76, 1
        %s270 = smul.addr %s269, 16
        %s271 = scalar_lea.vmem [#allocation5], %s270
        // Predicated region
        $region37: #{tpu_custom_call.1} parent=31 // pred_check
          %p272 = pneg %p89
        $region38: #{tpu_custom_call.1} parent=31 // pred_check_branch
          %274 = sbr.rel (%p272) target = $region40
        $region39: #{tpu_custom_call.1} parent=31 // pred_region
          %275 = dma.done %s268, 256
        $region40: #{tpu_custom_call.1} parent=31 // pred_fallthru
          _
        %s276 = sand.u32 %s28, 1
        %s277 = scalar_lea.sflag [#allocation6], %s276
        %s278 = sand.u32 %s102, 1
        %s279 = smul.addr %s278, 16
        %s280 = scalar_lea.vmem [#allocation7], %s279
        // Predicated region
        $region41: #{tpu_custom_call.1} parent=31 // pred_check
          %p281 = pneg %p115
        $region42: #{tpu_custom_call.1} parent=31 // pred_check_branch
          %283 = sbr.rel (%p281) target = $region44
        $region43: #{tpu_custom_call.1} parent=31 // pred_region
          %284 = dma.done %s277, 256
        $region44: #{tpu_custom_call.1} parent=31 // pred_fallthru
          _
        %s285 = sand.u32 %s50, 1
        %s286 = scalar_lea.sflag [#allocation3], %s285
        %s287 = sand.u32 %s50, 1
        %s288 = smul.addr %s287, 8
        %s289 = scalar_lea.vmem [#allocation2], %s288
        %p290 = pneg %p63
        %p291 = pneg %p60
        %s292 = sand.u32 %s28, 1
        %s293 = scalar_lea.sflag [#allocation6], %s292
        %s294 = sand.u32 %s76, 1
        %s295 = smul.addr %s294, 16
        %s296 = scalar_lea.vmem [#allocation5], %s295
        %p297 = pneg %p89
        %p298 = pneg %p86
        %s299 = sand.u32 %s28, 1
        %s300 = scalar_lea.sflag [#allocation6], %s299
        %s301 = sand.u32 %s102, 1
        %s302 = smul.addr %s301, 16
        %s303 = scalar_lea.vmem [#allocation7], %s302
        %p304 = pneg %p115
        %p305 = pneg %p112
        %p306 = pneg %p143
        %p307 = pneg %p140
        %s308 = sand.u32 %s130, 1
        %s309 = scalar_lea.sflag [#allocation4], %s308
        %s310 = sand.u32 %s130, 1
        %s311 = smul.addr %s310, 8
        %s312 = scalar_lea.vmem [#allocation8], %s311
        %p313 = pneg %p171
        %p314 = pneg %p168
        %s315 = sand.u32 %s158, 1
        %s316 = scalar_lea.sflag [#allocation10], %s315
        %s317 = sand.u32 %s158, 1
        %s318 = smul.addr %s317, 8
        %s319 = scalar_lea.vmem [#allocation9], %s318
        %v320 = vld [vmem:[%s262] sm:$0xff]
        %v321 = vmul.f32 %v320, 0.17677669
        %v322 = vld [vmem:[%s271] sm:$0xff]
        %v323 = vld [vmem:[%s271 + $0x8] sm:$0xff]
        %v324 = vld [vmem:[%s280] sm:$0xff]
        %v325 = vld [vmem:[%s280 + $0x8] sm:$0xff]
        %vm326 = vcmask 261120
        %v328 = vsel %vm326, %v321, 0
        %v331 = vsel %vm326, %v322, 0
        %v334 = vsel %vm326, %v323, 0
        %336 = vmatprep.subr.mxu0 0.0
        %337 = vmatpush1.xpose.msra.mxu0 0.0
        %338 = vmatprep.subr.mxu0 0.0
        %339 = vmatpush1.xpose.msra.mxu0 0.0
        %340 = vmatprep.subr.mxu0 0.0
        %341 = vmatpush1.xpose.msra.mxu0 0.0
        %342 = vmatprep.subr.mxu0 0.0
        %343 = vmatpush1.xpose.msra.mxu0 0.0
        %344 = vmatprep.subr.mxu0 0.0
        %345 = vmatpush1.xpose.msra.mxu0 0.0
        %346 = vmatprep.subr.mxu0 0.0
        %347 = vmatpush1.xpose.msra.mxu0 0.0
        %348 = vmatprep.subr.mxu0 0.0
        %349 = vmatpush1.xpose.msra.mxu0 0.0
        %350 = vmatprep.subr.mxu0 0.0
        %351 = vmatpush1.xpose.msra.mxu0 0.0
        %352 = vmatprep.subr.mxu0 0.0
        %353 = vmatpush1.xpose.msra.mxu0 0.0
        %354 = vmatprep.subr.mxu0 0.0
        %355 = vmatpush1.xpose.msra.mxu0 0.0
        %356 = vmatprep.subr.mxu0 0.0
        %357 = vmatpush1.xpose.msra.mxu0 0.0
        %358 = vmatprep.subr.mxu0 0.0
        %359 = vmatpush1.xpose.msra.mxu0 0.0
        %360 = vmatprep.subr.mxu0 0.0
        %361 = vmatpush1.xpose.msra.mxu0 0.0
        %362 = vmatprep.subr.mxu0 0.0
        %363 = vmatpush1.xpose.msra.mxu0 0.0
        %364 = vmatprep.subr.mxu0 0.0
        %365 = vmatpush1.xpose.msra.mxu0 %v334
        %366 = vmatprep.subr.mxu0 0.0
        %367 = vmatpush1.xpose.msra.mxu0 %v331
        %368 = vmatprep.subr.mxu0 0.0
        %369 = vmatpush2.xpose.msra.mxu0 0.0
        %370 = vmatprep.subr.mxu0 0.0
        %371 = vmatpush2.xpose.msra.mxu0 0.0
        %372 = vmatprep.subr.mxu0 0.0
        %373 = vmatpush2.xpose.msra.mxu0 0.0
        %374 = vmatprep.subr.mxu0 0.0
        %375 = vmatpush2.xpose.msra.mxu0 0.0
        %376 = vmatprep.subr.mxu0 0.0
        %377 = vmatpush2.xpose.msra.mxu0 0.0
        %378 = vmatprep.subr.mxu0 0.0
        %379 = vmatpush2.xpose.msra.mxu0 0.0
        %380 = vmatprep.subr.mxu0 0.0
        %381 = vmatpush2.xpose.msra.mxu0 0.0
        %382 = vmatprep.subr.mxu0 0.0
        %383 = vmatpush2.xpose.msra.mxu0 0.0
        %384 = vmatprep.subr.mxu0 0.0
        %385 = vmatpush2.xpose.msra.mxu0 0.0
        %386 = vmatprep.subr.mxu0 0.0
        %387 = vmatpush2.xpose.msra.mxu0 0.0
        %388 = vmatprep.subr.mxu0 0.0
        %389 = vmatpush2.xpose.msra.mxu0 0.0
        %390 = vmatprep.subr.mxu0 0.0
        %391 = vmatpush2.xpose.msra.mxu0 0.0
        %392 = vmatprep.subr.mxu0 0.0
        %393 = vmatpush2.xpose.msra.mxu0 0.0
        %394 = vmatprep.subr.mxu0 0.0
        %395 = vmatpush2.xpose.msra.mxu0 0.0
        %396 = vmatprep.subr.mxu0 0.0
        %397 = vmatpush2.xpose.msra.mxu0 0.0
        %398 = vmatprep.subr.mxu0 0.0
        %399 = vmatpush2.xpose.msra.mxu0 0.0
        %400 = vmatprep.mubr.f32.mxu0 0.0
        %401 = vmatmul.mubr.f32.gmra.mxu0 %v328
        %v402 = vpop.f32.mrf.mxu0
        %v403 = vadd.f32 0.0, %v402
        %v404 = vpop.f32.mrf.mxu0
        %405 = vdwg.mxu0
        %vm406 = vcmask 130048
        %v407 = vsel %vm406, %v403, -inf
        %408 = vmax.xlane.f32.xlu0 %v407
        %v409 = vpop.xlane.xlu0 %408
        %v410 = vsub.f32 %v403, %v409
        %v411 = vmul.f32 %v410, 1.442695
        %v412 = vpow.pop %v411
        %v413 = vsel %vm406, %v412, 0.0
        %414 = vadd.xlane.f32.xlu0 %v413
        %v415 = vpop.xlane.xlu0 %414
        %v416 = vrcp.pop %v415
        %v417 = vmul.f32 %v412, %v416
        %418 = vst.msk [vmem:[%s319] sm:$0xff] %vm406, %v417
        %v420 = vsel %vm406, %v417, 0
        %422 = vmatprep.subr.mxu0 0.0
        %423 = vmatpush1.msra.mxu0 0.0
        %424 = vmatprep.subr.mxu0 0.0
        %425 = vmatpush1.msra.mxu0 0.0
        %426 = vmatprep.subr.mxu0 0.0
        %427 = vmatpush1.msra.mxu0 0.0
        %428 = vmatprep.subr.mxu0 0.0
        %429 = vmatpush1.msra.mxu0 0.0
        %430 = vmatprep.subr.mxu0 0.0
        %431 = vmatpush1.msra.mxu0 0.0
        %432 = vmatprep.subr.mxu0 0.0
        %433 = vmatpush1.msra.mxu0 0.0
        %434 = vmatprep.subr.mxu0 0.0
        %435 = vmatpush1.msra.mxu0 0.0
        %436 = vmatprep.subr.mxu0 0.0
        %437 = vmatpush1.msra.mxu0 0.0
        %438 = vmatprep.subr.mxu0 0.0
        %439 = vmatpush1.msra.mxu0 0.0
        %440 = vmatprep.subr.mxu0 0.0
        %441 = vmatpush1.msra.mxu0 0.0
        %442 = vmatprep.subr.mxu0 0.0
        %443 = vmatpush1.msra.mxu0 0.0
        %444 = vmatprep.subr.mxu0 0.0
        %445 = vmatpush1.msra.mxu0 0.0
        %446 = vmatprep.subr.mxu0 0.0
        %447 = vmatpush1.msra.mxu0 0.0
        %448 = vmatprep.subr.mxu0 0.0
        %449 = vmatpush1.msra.mxu0 0.0
        %450 = vmatprep.subr.mxu0 0.0
        %451 = vmatpush1.msra.mxu0 %v325
        %452 = vmatprep.subr.mxu0 0.0
        %453 = vmatpush1.msra.mxu0 %v324
        %454 = vmatprep.subr.mxu0 0.0
        %455 = vmatpush2.msra.mxu0 0.0
        %456 = vmatprep.subr.mxu0 0.0
        %457 = vmatpush2.msra.mxu0 0.0
        %458 = vmatprep.subr.mxu0 0.0
        %459 = vmatpush2.msra.mxu0 0.0
        %460 = vmatprep.subr.mxu0 0.0
        %461 = vmatpush2.msra.mxu0 0.0
        %462 = vmatprep.subr.mxu0 0.0
        %463 = vmatpush2.msra.mxu0 0.0
        %464 = vmatprep.subr.mxu0 0.0
        %465 = vmatpush2.msra.mxu0 0.0
        %466 = vmatprep.subr.mxu0 0.0
        %467 = vmatpush2.msra.mxu0 0.0
        %468 = vmatprep.subr.mxu0 0.0
        %469 = vmatpush2.msra.mxu0 0.0
        %470 = vmatprep.subr.mxu0 0.0
        %471 = vmatpush2.msra.mxu0 0.0
        %472 = vmatprep.subr.mxu0 0.0
        %473 = vmatpush2.msra.mxu0 0.0
        %474 = vmatprep.subr.mxu0 0.0
        %475 = vmatpush2.msra.mxu0 0.0
        %476 = vmatprep.subr.mxu0 0.0
        %477 = vmatpush2.msra.mxu0 0.0
        %478 = vmatprep.subr.mxu0 0.0
        %479 = vmatpush2.msra.mxu0 0.0
        %480 = vmatprep.subr.mxu0 0.0
        %481 = vmatpush2.msra.mxu0 0.0
        %482 = vmatprep.subr.mxu0 0.0
        %483 = vmatpush2.msra.mxu0 0.0
        %484 = vmatprep.subr.mxu0 0.0
        %485 = vmatpush2.msra.mxu0 0.0
        %486 = vmatprep.mubr.f32.mxu0 0.0
        %487 = vmatmul.mubr.f32.gmra.mxu0 %v420
        %v488 = vpop.f32.mrf.mxu0
        %v489 = vadd.f32 0.0, %v488
        %v490 = vpop.f32.mrf.mxu0
        %491 = vdwg.mxu0
        %492 = vst.msk [vmem:[%s312] sm:$0xff] %vm326, %v489
        %s493 = sand.u32 %s130, 1
        %s494 = scalar_lea.sflag [#allocation4], %s493
        %s495 = sand.u32 %s130, 1
        %s496 = smul.addr %s495, 8
        %s497 = scalar_lea.vmem [#allocation8], %s496
        %s498 = sand.u32 %s158, 1
        %s499 = scalar_lea.sflag [#allocation10], %s498
        %s500 = sand.u32 %s158, 1
        %s501 = smul.addr %s500, 8
        %s502 = scalar_lea.vmem [#allocation9], %s501
        // Predicated region
        $region45: #{tpu_custom_call.1} parent=31 // pred_check
          %p503 = pneg %p140
        $region46: #{tpu_custom_call.1} parent=31 // pred_check_branch
          %505 = sbr.rel (%p503) target = $region48
        $region47: #{tpu_custom_call.1} parent=31 // pred_region
          %s507 = ssub.s32 128, 128
          %508 = vsyncadd %s494, %s507
          %s509 = sadd.s32 %s33, %s32
          %s510 = smul.addr %s509, 128
          %s511 = scalar_lea.hbm %s3, %s510
          %s513 = sshll.u32 %s497, 4
          %s514 = int_to_ptr.vmem [resolvable:$true] %s513
          %516 = dma.vmem_to_hbm [thread:$0]  %s514, 128, %s511, %s494
        $region48: #{tpu_custom_call.1} parent=31 // pred_fallthru
          _
        // Predicated region
        $region49: #{tpu_custom_call.1} parent=31 // pred_check
          %p517 = pneg %p168
        $region50: #{tpu_custom_call.1} parent=31 // pred_check_branch
          %519 = sbr.rel (%p517) target = $region52
        $region51: #{tpu_custom_call.1} parent=31 // pred_region
          %s521 = ssub.s32 128, 128
          %522 = vsyncadd %s499, %s521
          %s523 = sadd.s32 %s33, %s32
          %s524 = smul.addr %s523, 128
          %s525 = scalar_lea.hbm %s4, %s524
          %s527 = sshll.u32 %s502, 4
          %s528 = int_to_ptr.vmem [resolvable:$true] %s527
          %530 = dma.vmem_to_hbm [thread:$0]  %s528, 128, %s525, %s499
        $region52: #{tpu_custom_call.1} parent=31 // pred_fallthru
          _
      $region32: #{tpu_custom_call.1} parent=5 // pred_fallthru
        _
      %p531 = scmp.le.s32.totalorder 2, %s23
      // Predicated region
      $region53: #{tpu_custom_call.1} parent=5 // pred_check
        %p532 = pneg %p531
      $region54: #{tpu_custom_call.1} parent=5 // pred_check_branch
        %534 = sbr.rel (%p532) target = $region56
      $region55: #{tpu_custom_call.1} parent=5 // pred_region
        %s535 = ssub.s32 %s23, 2
        // Predicated region
        $region57: #{tpu_custom_call.1} parent=55 // pred_check
          %p536 = pneg %p146
        $region58: #{tpu_custom_call.1} parent=55 // pred_check_branch
          %538 = sbr.rel (%p536) target = $region60
        $region59: #{tpu_custom_call.1} parent=55 // pred_region
          %s539 = sand.u32 %s131, 1
          %s540 = scalar_lea.sflag [#allocation4], %s539
          %s541 = sand.u32 %s131, 1
          %s542 = smul.addr %s541, 8
          %s543 = scalar_lea.vmem [#allocation8], %s542
          %544 = dma.done %s540, 128
        $region60: #{tpu_custom_call.1} parent=55 // pred_fallthru
          _
        // Predicated region
        $region61: #{tpu_custom_call.1} parent=55 // pred_check
          %p545 = pneg %p174
        $region62: #{tpu_custom_call.1} parent=55 // pred_check_branch
          %547 = sbr.rel (%p545) target = $region64
        $region63: #{tpu_custom_call.1} parent=55 // pred_region
          %s548 = sand.u32 %s159, 1
          %s549 = scalar_lea.sflag [#allocation10], %s548
          %s550 = sand.u32 %s159, 1
          %s551 = smul.addr %s550, 8
          %s552 = scalar_lea.vmem [#allocation9], %s551
          %553 = dma.done %s549, 128
        $region64: #{tpu_custom_call.1} parent=55 // pred_fallthru
          _
      $region56: #{tpu_custom_call.1} parent=5 // pred_fallthru
        _
    $region6: #{tpu_custom_call.1} parent=1 // loop_footer
      %s27 = sadd.s32 1, %s23
    $region7: #{tpu_custom_call.1} parent=1 // loop_footer_branch
      %22 = sbr.rel target = $region3
    $region8: #{tpu_custom_call.1} parent=1 // loop_exit
      _
    %554 = vsyncpa [#allocation3], 1
    %s555 = scalar_lea.sflag [#allocation3], 1
    %556 = vsyncpa %s555, 1
    %557 = vsyncpa [#allocation6], 1
    %s558 = scalar_lea.sflag [#allocation6], 1
    %559 = vsyncpa %s558, 1
    %560 = vsyncpa [#allocation4], 1
    %s561 = scalar_lea.sflag [#allocation4], 1
    %562 = vsyncpa %s561, 1
    %563 = vsyncpa [#allocation10], 1
    %s564 = scalar_lea.sflag [#allocation10], 1
    %565 = vsyncpa %s564, 1

</llo_original>
